<compile_context>
chip_gen: v7x
topology: tpu7x:2x2x1
jax: 0.10.0
libtpu: 0.0.40
codegen_flags: <defaults>
</compile_context>

<pallas_src>
import functools

import jax
import jax.numpy as jnp
from jax.experimental import pallas as pl
from jax.experimental.pallas import tpu as pltpu


def _round_up(x, m):
    return ((x + m - 1) // m) * m


# ----------------------------- Pallas kernel -------------------------------
def _rgcn_layer_kernel(a_ref, xw_ref, ddst_ref, b_ref, o_ref, part_ref, *,
                       apply_relu):
    """o[i] = relu?( sum_r d_dst_r[i] * (A_r[i, :] @ XW_r) + sum_r b_r ).

    Grid: (dst_tile i [parallel], relation r [arbitrary], src_tile k [arbitrary]).
      a_ref    (1, tm, tk)       {0,1} adjacency tile (narrow dtype, exact)
      xw_ref   (1, tk, f_out_p)  (d_src^-1/2 * X) @ W_r tile
      ddst_ref (1, tm, 1)        d_dst^-1/2 for relation r, dst tile i (f32)
      b_ref    (1, f_out_p)      sum_r b_r (f32)
      o_ref    (tm, f_out_p)     f32 output block, resident across (r, k)
      part_ref (tm, f_out_p)     f32 per-relation partial (VMEM scratch)
    """
    r = pl.program_id(1)
    k = pl.program_id(2)
    last_r = pl.num_programs(1) - 1
    last_k = pl.num_programs(2) - 1

    @pl.when(jnp.logical_and(r == 0, k == 0))
    def _():
        o_ref[...] = jnp.zeros_like(o_ref)

    @pl.when(k == 0)
    def _():
        part_ref[...] = jnp.zeros_like(part_ref)

    xw = xw_ref[0]
    a = a_ref[0].astype(xw.dtype)      # no-op when A already matches XW dtype
    part_ref[...] += jnp.dot(a, xw, preferred_element_type=jnp.float32)

    @pl.when(k == last_k)
    def _():
        # per-relation dst normalization, then fold into the cross-relation sum
        o_ref[...] += part_ref[...] * ddst_ref[0]

    @pl.when(jnp.logical_and(r == last_r, k == last_k))
    def _():
        out = o_ref[...] + b_ref[...]          # bias (summed over relations)
        if apply_relu:
            out = jnp.maximum(out, 0.0)
        o_ref[...] = out


# --------------------------- graph preparation -----------------------------
def prepare_graph(adj, *, a_dtype=jnp.bfloat16, tm_max=512, tk_max=2048):
    """Pad/cast the {0,1} adjacency ONCE (reused by both layers) and factor the
    'both' normalization into per-node scale vectors.  adj: (R, N_dst, N_src)."""
    R, n_dst, n_src = adj.shape
    adj01 = (adj != 0)
    in_deg = jnp.clip(adj01.sum(axis=2).astype(jnp.float32), 1.0, None)   # (R, N_dst)
    out_deg = jnp.clip(adj01.sum(axis=1).astype(jnp.float32), 1.0, None)  # (R, N_src)
    ddst = in_deg ** -0.5
    dsrc = out_deg ** -0.5

    # packed-sublane multiple for the A dtype (f32:8, bf16:16, int8/fp8:32)
    sub = {4: 8, 2: 16, 1: 32}[jnp.dtype(a_dtype).itemsize]
    tm = min(tm_max, _round_up(n_dst, sub))
    # keep >=2 dst tiles when possible so the 'parallel' i axis can split
    # across v7x's two TensorCores
    while tm > sub and pl.cdiv(n_dst, tm) < 2:
        tm = _round_up(tm // 2, sub)
    tk = min(tk_max, _round_up(n_src, 128))

    n_dst_p = _round_up(n_dst, tm)
    n_src_p = _round_up(n_src, tk)

    a_p = jnp.zeros((R, n_dst_p, n_src_p), a_dtype)
    a_p = a_p.at[:, :n_dst, :n_src].set(adj01.astype(a_dtype))
    ddst_p = jnp.zeros((R, n_dst_p, 1), jnp.float32)
    ddst_p = ddst_p.at[:, :n_dst, 0].set(ddst)

    xw_dtype = (jnp.float32 if jnp.dtype(a_dtype) == jnp.dtype(jnp.float32)
                else jnp.bfloat16)
    return dict(a_p=a_p, ddst_p=ddst_p, dsrc=dsrc, xw_dtype=xw_dtype,
                tm=tm, tk=tk, n_dst=n_dst, n_src=n_src,
                n_dst_p=n_dst_p, n_src_p=n_src_p)


# ------------------------------- one layer ---------------------------------
def rgcn_layer(g, x, w, b, *, apply_relu):
    """g: prepared graph dict; x: (N_src, F_in); w: (R, F_in, F_out); b: (R, F_out)."""
    R = g["a_p"].shape[0]
    f_out = w.shape[2]
    f_out_p = _round_up(f_out, 128)
    tm, tk = g["tm"], g["tk"]
    n_dst_p, n_src_p = g["n_dst_p"], g["n_src_p"]

    # Precompute XW_r = (d_src^-1/2 * X) @ W_r once per layer (removes the
    # per-dst-tile small matmul and repeated X DMAs from the bound kernel).
    xw = jnp.einsum('sf,rfo->rso', x.astype(jnp.float32), w.astype(jnp.float32))
    xw = xw * g["dsrc"][:, :, None]
    xw_p = jnp.zeros((R, n_src_p, f_out_p), g["xw_dtype"])
    xw_p = xw_p.at[:, :g["n_src"], :f_out].set(xw.astype(g["xw_dtype"]))

    b_sum = jnp.zeros((1, f_out_p), jnp.float32)
    b_sum = b_sum.at[0, :f_out].set(b.sum(axis=0).astype(jnp.float32))

    grid = (n_dst_p // tm, R, n_src_p // tk)

    out_p = pl.pallas_call(
        functools.partial(_rgcn_layer_kernel, apply_relu=apply_relu),
        out_shape=jax.ShapeDtypeStruct((n_dst_p, f_out_p), jnp.float32),
        grid_spec=pltpu.PrefetchScalarGridSpec(
            num_scalar_prefetch=0,
            grid=grid,
            in_specs=[
                pl.BlockSpec((1, tm, tk), lambda i, r, k: (r, i, k)),        # A_r tile
                pl.BlockSpec((1, tk, f_out_p), lambda i, r, k: (r, k, 0)),   # XW_r tile
                pl.BlockSpec((1, tm, 1), lambda i, r, k: (r, i, 0)),         # d_dst^-1/2
                pl.BlockSpec((1, f_out_p), lambda i, r, k: (0, 0)),          # sum_r b_r
            ],
            out_specs=pl.BlockSpec((tm, f_out_p), lambda i, r, k: (i, 0)),   # accumulator
            scratch_shapes=[pltpu.VMEM((tm, f_out_p), jnp.float32)],         # per-rel partial
        ),
        compiler_params=pltpu.CompilerParams(
            dimension_semantics=("parallel", "arbitrary", "arbitrary"),
            vmem_limit_bytes=48 * 1024 * 1024),   # under v7x's 64 MiB physical
    )(g["a_p"], xw_p, g["ddst_p"], b_sum)

    return out_p[:g["n_dst"], :f_out]


# ----------------------------- glue / params -------------------------------
def init_params(key, num_rels, in_feats, hid_feats, out_feats):
    """Deterministic init: xavier-uniform weights, zero bias (DGL GraphConv init)."""
    k1, k2 = jax.random.split(key)

    def xavier(k, shape):
        fan_in, fan_out = shape[-2], shape[-1]
        limit = jnp.sqrt(6.0 / (fan_in + fan_out))
        return jax.random.uniform(k, shape, jnp.float32, -limit, limit)

    w1 = xavier(k1, (num_rels, in_feats, hid_feats))
    b1 = jnp.zeros((num_rels, hid_feats), jnp.float32)
    w2 = xavier(k2, (num_rels, hid_feats, out_feats))
    b2 = jnp.zeros((num_rels, out_feats), jnp.float32)
    return w1, b1, w2, b2


def rgcn_forward(adj, x, params, *, a_dtype=jnp.bfloat16, tm_max=512, tk_max=2048):
    """Full 2-layer RGCN forward (conv1 -> ReLU -> conv2). adj is the raw
    binary (R, N, N) adjacency; padding/casting/normalization happen once."""
    w1, b1, w2, b2 = params
    g = prepare_graph(adj, a_dtype=a_dtype, tm_max=tm_max, tk_max=tk_max)
    h = rgcn_layer(g, x, w1, b1, apply_relu=True)
    h = rgcn_layer(g, h, w2, b2, apply_relu=False)
    return h


# ------------------------------ pure-JAX ref --------------------------------
def normalize_adjacency(adj):
    """DGL GraphConv norm='both': scale by out_deg(src)^-1/2 and in_deg(dst)^-1/2."""
    adj01 = (adj != 0).astype(jnp.float32)
    in_deg = jnp.clip(adj01.sum(axis=2), 1.0, None)    # (R, N_dst)
    out_deg = jnp.clip(adj01.sum(axis=1), 1.0, None)   # (R, N_src)
    return adj01 * (in_deg[:, :, None] ** -0.5) * (out_deg[:, None, :] ** -0.5)


def rgcn_reference(adj, x, params):
    w1, b1, w2, b2 = params
    a = normalize_adjacency(adj)
    h = jnp.maximum(jnp.einsum('rds,sf,rfo->do', a, x, w1) + b1.sum(0), 0.0)
    return jnp.einsum('rds,sf,rfo->do', a, h, w2) + b2.sum(0)


if __name__ == "__main__":
    key = jax.random.PRNGKey(0)
    k_adj, k_x, k_p, k_adj2, k_x2 = jax.random.split(key, 5)

    in_feats, hid_feats, out_feats = 16, 32, 16
    rel_names = ("follows", "likes", "cites")
    R = len(rel_names)
    params = init_params(k_p, R, in_feats, hid_feats, out_feats)

    # --- small graph (single dst/src tile per relation) ---------------------
    num_nodes = 8
    adj = (jax.random.uniform(k_adj, (R, num_nodes, num_nodes)) < 0.3).astype(jnp.float32)
    x = jax.random.normal(k_x, (num_nodes, in_feats), jnp.float32)
    ref = rgcn_reference(adj, x, params)

    # f32-A path
    out_f32 = jax.block_until_ready(rgcn_forward(adj, x, params, a_dtype=jnp.float32))
    assert out_f32.shape == (num_nodes, out_feats)
    assert jnp.allclose(out_f32, ref, atol=1e-3, rtol=1e-3), "f32 mismatch vs reference"

    # bf16-A path (default: exact {0,1} A, XW rounded once, f32 accumulation)
    out_bf16 = jax.block_until_ready(rgcn_forward(adj, x, params))
    rel_err = jnp.linalg.norm(out_bf16 - ref) / (jnp.linalg.norm(ref) + 1e-12)
    assert out_bf16.shape == (num_nodes, out_feats)
    assert rel_err < 5e-2, f"bf16 relative error too large: {rel_err}"

    # --- multi-tile grid (3 dst tiles x 3 relations x 2 src tiles) ----------
    n2 = 192
    adj2 = (jax.random.uniform(k_adj2, (R, n2, n2)) < 0.05).astype(jnp.float32)
    x2 = jax.random.normal(k_x2, (n2, in_feats), jnp.float32)
    ref2 = rgcn_reference(adj2, x2, params)
    out2 = jax.block_until_ready(
        rgcn_forward(adj2, x2, params, a_dtype=jnp.bfloat16, tm_max=64, tk_max=128))
    rel_err2 = jnp.linalg.norm(out2 - ref2) / (jnp.linalg.norm(ref2) + 1e-12)
    assert out2.shape == (n2, out_feats)
    assert rel_err2 < 5e-2, f"multi-tile bf16 relative error too large: {rel_err2}"

    print("KERNEL_OK")
</pallas_src>

<mosaic_0001>
module attributes {stable_mosaic.version = 11 : i64} {
  func.func @_rgcn_layer_kernel(%arg0: i32, %arg1: i32, %arg2: i32, %arg3: memref<1x8x128xf32, #tpu.memory_space<vmem>>, %arg4: memref<1x128x128xf32, #tpu.memory_space<vmem>>, %arg5: memref<1x8x1xf32, #tpu.memory_space<vmem>>, %arg6: memref<1x128xf32, #tpu.memory_space<vmem>>, %arg7: memref<8x128xf32, #tpu.memory_space<vmem>>, %arg8: memref<8x128xf32, #tpu.memory_space<vmem>>) attributes {dimension_semantics = [#tpu.dimension_semantics<parallel>, #tpu.dimension_semantics<arbitrary>, #tpu.dimension_semantics<arbitrary>], iteration_bounds = array<i64: 1, 3, 1>, scalar_prefetch = 0 : i64, scratch_operands = 1 : i64, tpu.core_type = #tpu.core_type<tc>, window_params = [{transform_indices = @transform_0, window_bounds = array<i64: 1, 8, 128>}, {transform_indices = @transform_1, window_bounds = array<i64: 1, 128, 128>}, {transform_indices = @transform_2, window_bounds = array<i64: 1, 8, 1>}, {pipeline_mode = #tpu.pipeline_mode<synchronous>, transform_indices = @transform_3, window_bounds = array<i64: 1, 128>}, {transform_indices = @transform_4, window_bounds = array<i64: 8, 128>}]} {
    %c0_i32 = arith.constant 0 : i32
    %0 = arith.cmpi eq, %arg1, %c0_i32 : i32
    %c0_i32_0 = arith.constant 0 : i32
    %1 = arith.cmpi eq, %arg2, %c0_i32_0 : i32
    %2 = arith.andi %0, %1 : i1
    %3 = arith.extui %2 : i1 to i32
    %c0_i32_1 = arith.constant 0 : i32
    %4 = arith.cmpi ne, %3, %c0_i32_1 : i32
    scf.if %4 {
      %cst_17 = arith.constant 0.000000e+00 : f32
      %24 = vector.broadcast %cst_17 : f32 to vector<8x128xf32>
      %c0_18 = arith.constant 0 : index
      %c0_19 = arith.constant 0 : index
      %25 = vector.load %arg7[%c0_18, %c0_19] : memref<8x128xf32, #tpu.memory_space<vmem>>, vector<8x128xf32>
      tpu.vector_store %arg7[%c0_18, %c0_19], %24 {strides = array<i32>} : memref<8x128xf32, #tpu.memory_space<vmem>>, vector<8x128xf32>,
    } else {
    }
    %c0_i32_2 = arith.constant 0 : i32
    %5 = arith.cmpi eq, %arg2, %c0_i32_2 : i32
    %6 = arith.extui %5 : i1 to i32
    %c0_i32_3 = arith.constant 0 : i32
    %7 = arith.cmpi ne, %6, %c0_i32_3 : i32
    scf.if %7 {
      %cst_17 = arith.constant 0.000000e+00 : f32
      %24 = vector.broadcast %cst_17 : f32 to vector<8x128xf32>
      %c0_18 = arith.constant 0 : index
      %c0_19 = arith.constant 0 : index
      %25 = vector.load %arg8[%c0_18, %c0_19] : memref<8x128xf32, #tpu.memory_space<vmem>>, vector<8x128xf32>
      tpu.vector_store %arg8[%c0_18, %c0_19], %24 {strides = array<i32>} : memref<8x128xf32, #tpu.memory_space<vmem>>, vector<8x128xf32>,
    } else {
    }
    %c0 = arith.constant 0 : index
    %c0_4 = arith.constant 0 : index
    %c0_5 = arith.constant 0 : index
    %8 = vector.load %arg4[%c0, %c0_4, %c0_5] : memref<1x128x128xf32, #tpu.memory_space<vmem>>, vector<1x128x128xf32>
    %9 = vector.shape_cast %8 : vector<1x128x128xf32> to vector<128x128xf32>
    %c0_6 = arith.constant 0 : index
    %c0_7 = arith.constant 0 : index
    %c0_8 = arith.constant 0 : index
    %10 = vector.load %arg3[%c0_6, %c0_7, %c0_8] : memref<1x8x128xf32, #tpu.memory_space<vmem>>, vector<1x8x128xf32>
    %11 = vector.shape_cast %10 : vector<1x8x128xf32> to vector<8x128xf32>
    %c0_9 = arith.constant 0 : index
    %c0_10 = arith.constant 0 : index
    %12 = vector.load %arg8[%c0_9, %c0_10] : memref<8x128xf32, #tpu.memory_space<vmem>>, vector<8x128xf32>
    %cst = arith.constant dense<0.000000e+00> : vector<8x128xf32>
    %13 = tpu.matmul %11, %9, %cst {dimension_numbers = #tpu.dot_dimension_numbers<[1], [0], [0], [1], [0, 0, 1, 1], [], []>} : vector<8x128xf32>, vector<128x128xf32>, vector<8x128xf32> -> vector<8x128xf32>
    %14 = arith.addf %12, %13 : vector<8x128xf32>
    %c0_11 = arith.constant 0 : index
    %c0_12 = arith.constant 0 : index
    %15 = vector.load %arg8[%c0_11, %c0_12] : memref<8x128xf32, #tpu.memory_space<vmem>>, vector<8x128xf32>
    tpu.vector_store %arg8[%c0_11, %c0_12], %14 {strides = array<i32>} : memref<8x128xf32, #tpu.memory_space<vmem>>, vector<8x128xf32>,
    %c0_i32_13 = arith.constant 0 : i32
    %16 = arith.cmpi eq, %arg2, %c0_i32_13 : i32
    %17 = arith.extui %16 : i1 to i32
    %c0_i32_14 = arith.constant 0 : i32
    %18 = arith.cmpi ne, %17, %c0_i32_14 : i32
    scf.if %18 {
      %c0_17 = arith.constant 0 : index
      %c0_18 = arith.constant 0 : index
      %24 = vector.load %arg7[%c0_17, %c0_18] : memref<8x128xf32, #tpu.memory_space<vmem>>, vector<8x128xf32>
      %c0_19 = arith.constant 0 : index
      %c0_20 = arith.constant 0 : index
      %25 = vector.load %arg8[%c0_19, %c0_20] : memref<8x128xf32, #tpu.memory_space<vmem>>, vector<8x128xf32>
      %c0_21 = arith.constant 0 : index
      %c0_22 = arith.constant 0 : index
      %c0_23 = arith.constant 0 : index
      %26 = vector.load %arg5[%c0_21, %c0_22, %c0_23] : memref<1x8x1xf32, #tpu.memory_space<vmem>>, vector<1x8x1xf32>
      %27 = vector.shape_cast %26 : vector<1x8x1xf32> to vector<8x1xf32>
      %28 = vector.broadcast %27 : vector<8x1xf32> to vector<8x128xf32>
      %29 = arith.mulf %25, %28 : vector<8x128xf32>
      %30 = arith.addf %24, %29 : vector<8x128xf32>
      %c0_24 = arith.constant 0 : index
      %c0_25 = arith.constant 0 : index
      %31 = vector.load %arg7[%c0_24, %c0_25] : memref<8x128xf32, #tpu.memory_space<vmem>>, vector<8x128xf32>
      tpu.vector_store %arg7[%c0_24, %c0_25], %30 {strides = array<i32>} : memref<8x128xf32, #tpu.memory_space<vmem>>, vector<8x128xf32>,
    } else {
    }
    %c2_i32 = arith.constant 2 : i32
    %19 = arith.cmpi eq, %arg1, %c2_i32 : i32
    %c0_i32_15 = arith.constant 0 : i32
    %20 = arith.cmpi eq, %arg2, %c0_i32_15 : i32
    %21 = arith.andi %19, %20 : i1
    %22 = arith.extui %21 : i1 to i32
    %c0_i32_16 = arith.constant 0 : i32
    %23 = arith.cmpi ne, %22, %c0_i32_16 : i32
    scf.if %23 {
      %c0_17 = arith.constant 0 : index
      %c0_18 = arith.constant 0 : index
      %24 = vector.load %arg7[%c0_17, %c0_18] : memref<8x128xf32, #tpu.memory_space<vmem>>, vector<8x128xf32>
      %c0_19 = arith.constant 0 : index
      %c0_20 = arith.constant 0 : index
      %25 = vector.load %arg6[%c0_19, %c0_20] : memref<1x128xf32, #tpu.memory_space<vmem>>, vector<1x128xf32>
      %26 = vector.broadcast %25 : vector<1x128xf32> to vector<8x128xf32>
      %27 = arith.addf %24, %26 : vector<8x128xf32>
      %cst_21 = arith.constant 0.000000e+00 : f32
      %28 = vector.broadcast %cst_21 : f32 to vector<8x128xf32>
      %29 = arith.maximumf %27, %28 : vector<8x128xf32>
      %c0_22 = arith.constant 0 : index
      %c0_23 = arith.constant 0 : index
      %30 = vector.load %arg7[%c0_22, %c0_23] : memref<8x128xf32, #tpu.memory_space<vmem>>, vector<8x128xf32>
      tpu.vector_store %arg7[%c0_22, %c0_23], %29 {strides = array<i32>} : memref<8x128xf32, #tpu.memory_space<vmem>>, vector<8x128xf32>,
    } else {
    }
    return
  }
  func.func @transform_0(%arg0: i32, %arg1: i32, %arg2: i32) -> (i32, i32, i32) {
    %c0_i32 = arith.constant 0 : i32
    return %arg1, %arg0, %arg2 : i32, i32, i32
  }
  func.func @transform_1(%arg0: i32, %arg1: i32, %arg2: i32) -> (i32, i32, i32) {
    %c0_i32 = arith.constant 0 : i32
    %c0_i32_0 = arith.constant 0 : i32
    return %arg1, %arg2, %c0_i32 : i32, i32, i32
  }
  func.func @transform_2(%arg0: i32, %arg1: i32, %arg2: i32) -> (i32, i32, i32) {
    %c0_i32 = arith.constant 0 : i32
    %c0_i32_0 = arith.constant 0 : i32
    return %arg1, %arg0, %c0_i32 : i32, i32, i32
  }
  func.func @transform_3(%arg0: i32, %arg1: i32, %arg2: i32) -> (i32, i32) {
    %c0_i32 = arith.constant 0 : i32
    %c0_i32_0 = arith.constant 0 : i32
    %c0_i32_1 = arith.constant 0 : i32
    return %c0_i32, %c0_i32_0 : i32, i32
  }
  func.func @transform_4(%arg0: i32, %arg1: i32, %arg2: i32) -> (i32, i32) {
    %c0_i32 = arith.constant 0 : i32
    %c0_i32_0 = arith.constant 0 : i32
    return %arg0, %c0_i32 : i32, i32
  }
}

</mosaic_0001>

<llo_original>
// kernel: tpu_custom_call.1
$region0: #{tpu_custom_call.1}
  #allocation0 [shape = 'u32[]', space=smem, size = 0x4, offset = 0x4, fixed_abs, tag = 'smem constant byte address 0x4 - core index']
  #allocation1 [shape = 'u32[144,128]{1,0:T(1,128)}', space=vmem, size = 0x12000, scoped, tag = 'internal scratch']
  #allocation2 [shape = 'f32[8,128]{1,0:T(8,128)}', space=vmem, size = 0x1000, scoped, tag = 'scratch operand']
  %s0 = inlined_call_operand.vmem [shape: f32[3,8,128], index: 0, kind: input, shape index: {}]
  %s1 = inlined_call_operand.hbm [shape: f32[3,128,128], index: 1, kind: input, shape index: {}]
  %s2 = inlined_call_operand.vmem [shape: f32[3,8,1], index: 2, kind: input, shape index: {}]
  %s3 = inlined_call_operand.vmem [shape: f32[1,128], index: 3, kind: input, shape index: {}]
  %s4 = inlined_call_operand.hbm [shape: f32[8,128], index: 4, kind: output, shape index: {}]
  %s5 = sld [smem:[#allocation0]]
  $region69: #{tpu_custom_call.1} parent=0
    _
  %s7 = ssub.s32 1, %s5
  %s8 = scalar_select 0, %s7, %s5
  $region1: #{tpu_custom_call.1} parent=0
    #allocation3 [shape = 'u8[131072]{0}', space=vmem, size = 0x20000, scoped, tag = 'input window, operand 1']
    #allocation4 [shape = 's32[2]{0}', space=sflag, size = 0x8, scoped, tag = 'scoped memory for tpu_custom_call.1']
    #allocation5 [shape = 's32[2]{0}', space=sflag, size = 0x8, scoped, tag = 'scoped memory for tpu_custom_call.1']
    #allocation6 [shape = 'u8[4096]{0}', space=vmem, size = 0x1000, scoped, tag = 'output window, operand 0, single buffered']
    %9 = vsyncpa [#allocation4], 0
    %s10 = scalar_lea.sflag [#allocation4], 1
    %11 = vsyncpa %s10, 0
    %12 = vsyncpa [#allocation5], 0
    loop: start=0, step=1, limit=5
    $region2: #{tpu_custom_call.1} parent=1 // loop_pre_header
      _
    $region3: #{tpu_custom_call.1} parent=1 // loop_header
      %s14 = sphi 0, %s18
      %p15 = scmp.ge.s32.totalorder %s14, 5
      %s21 = sphi 0, %s40
      %s22 = sphi 0, %s36
      %s23 = sphi 0, %s32
      %s24 = sphi 0, %s21
      %s25 = sphi 0, %s22
      %s26 = sphi 0, %s23
      %s27 = sphi 0, %s24
      %s28 = sphi 0, %s25
      %s29 = sphi 0, %s26
      %s47 = sphi 0, %s49
      %s50 = sphi 0, %s47
      %s51 = sphi 0, %s50
      %s67 = sphi 0, %s51
      %s75 = sphi 0, %s77
      %s78 = sphi 0, %s75
      %s79 = sphi 0, %s78
      %s95 = sphi 0, %s79
      %s103 = sphi 0, %s105
      %s106 = sphi 0, %s103
      %s107 = sphi 0, %s106
      %s123 = sphi 0, %s107
      %s127 = sphi 0, %s127
      %s129 = sphi 0, %s127
      %s130 = sphi 0, %s129
      %s144 = sphi 0, %s130
      %s150 = sphi 0, %s152
      %s153 = sphi 0, %s150
      %s154 = sphi 0, %s153
      %s170 = sphi 0, %s154
    $region4: #{tpu_custom_call.1} parent=1 // loop_header_branch
      %17 = sbr.rel (%p15) target = $region8
    $region5: #{tpu_custom_call.1} parent=1 // loop_body
      %s19 = ssub.s32 %s14, 1
      %s20 = ssub.s32 %s14, 2
      %s30 = sadd.s32 1, %s23
      %p31 = scmp.ge.s32.totalorder %s30, 1
      %s32 = scalar_select %p31, 0, %s30
      %s33 = sadd.s32 1, %s22
      %s34 = scalar_select %p31, %s33, %s22
      %p35 = scmp.ge.s32.totalorder %s34, 3
      %s36 = scalar_select %p35, 0, %s34
      %s37 = sadd.s32 1, %s21
      %s38 = scalar_select %p35, %s37, %s21
      %p39 = scmp.ge.s32.totalorder %s38, 1
      %s40 = scalar_select %p39, 0, %s38
      %s41 = ssub.s32 %s22, %s36
      %s42 = ssub.s32 %s21, %s40
      %s43 = sor.u32 %s41, %s42
      %s44 = ssub.s32 %s23, %s32
      %s45 = sor.u32 %s43, %s44
      %p46 = scmp.eq.s32.totalorder %s45, 0
      %s48 = sadd.s32 %s47, 1
      %s49 = scalar_select %p46, %s47, %s48
      %p52 = pneg %p46
      %p53 = scmp.eq.s32.totalorder %s14, 2
      %p54 = por %p52, %p53
      %p55 = scmp.ne.s32.totalorder %s47, %s50
      %p56 = scmp.eq.s32.totalorder %s14, 0
      %p57 = por %p55, %p56
      %p58 = scmp.ne.s32.totalorder %s47, %s50
      %p59 = scmp.eq.s32.totalorder %s19, 2
      %p60 = por %p58, %p59
      %p61 = scmp.ne.s32.totalorder %s50, %s51
      %p62 = scmp.eq.s32.totalorder %s19, 0
      %p63 = por %p61, %p62
      %p64 = scmp.ne.s32.totalorder %s50, %s51
      %p65 = scmp.eq.s32.totalorder %s20, 2
      %p66 = por %p64, %p65
      %p68 = scmp.ne.s32.totalorder %s51, %s67
      %p69 = scmp.eq.s32.totalorder %s20, 0
      %p70 = por %p68, %p69
      %s71 = ssub.s32 %s22, %s36
      %s72 = ssub.s32 %s23, %s32
      %s73 = sor.u32 %s71, %s72
      %p74 = scmp.eq.s32.totalorder %s73, 0
      %s76 = sadd.s32 %s75, 1
      %s77 = scalar_select %p74, %s75, %s76
      %p80 = pneg %p74
      %p81 = scmp.eq.s32.totalorder %s14, 2
      %p82 = por %p80, %p81
      %p83 = scmp.ne.s32.totalorder %s75, %s78
      %p84 = scmp.eq.s32.totalorder %s14, 0
      %p85 = por %p83, %p84
      %p86 = scmp.ne.s32.totalorder %s75, %s78
      %p87 = scmp.eq.s32.totalorder %s19, 2
      %p88 = por %p86, %p87
      %p89 = scmp.ne.s32.totalorder %s78, %s79
      %p90 = scmp.eq.s32.totalorder %s19, 0
      %p91 = por %p89, %p90
      %p92 = scmp.ne.s32.totalorder %s78, %s79
      %p93 = scmp.eq.s32.totalorder %s20, 2
      %p94 = por %p92, %p93
      %p96 = scmp.ne.s32.totalorder %s79, %s95
      %p97 = scmp.eq.s32.totalorder %s20, 0
      %p98 = por %p96, %p97
      %s99 = ssub.s32 %s22, %s36
      %s100 = ssub.s32 %s21, %s40
      %s101 = sor.u32 %s99, %s100
      %p102 = scmp.eq.s32.totalorder %s101, 0
      %s104 = sadd.s32 %s103, 1
      %s105 = scalar_select %p102, %s103, %s104
      %p108 = pneg %p102
      %p109 = scmp.eq.s32.totalorder %s14, 2
      %p110 = por %p108, %p109
      %p111 = scmp.ne.s32.totalorder %s103, %s106
      %p112 = scmp.eq.s32.totalorder %s14, 0
      %p113 = por %p111, %p112
      %p114 = scmp.ne.s32.totalorder %s103, %s106
      %p115 = scmp.eq.s32.totalorder %s19, 2
      %p116 = por %p114, %p115
      %p117 = scmp.ne.s32.totalorder %s106, %s107
      %p118 = scmp.eq.s32.totalorder %s19, 0
      %p119 = por %p117, %p118
      %p120 = scmp.ne.s32.totalorder %s106, %s107
      %p121 = scmp.eq.s32.totalorder %s20, 2
      %p122 = por %p120, %p121
      %p124 = scmp.ne.s32.totalorder %s107, %s123
      %p125 = scmp.eq.s32.totalorder %s20, 0
      %p126 = por %p124, %p125
      %s128 = sadd.s32 %s127, 1
      %p131 = scmp.eq.s32.totalorder %s14, 2
      %p132 = scmp.ne.s32.totalorder %s127, %s129
      %p133 = scmp.eq.s32.totalorder %s14, 0
      %p134 = por %p132, %p133
      %p135 = scmp.ne.s32.totalorder %s127, %s129
      %p136 = scmp.eq.s32.totalorder %s19, 2
      %p137 = por %p135, %p136
      %p138 = scmp.ne.s32.totalorder %s129, %s130
      %p139 = scmp.eq.s32.totalorder %s19, 0
      %p140 = por %p138, %p139
      %p141 = scmp.ne.s32.totalorder %s129, %s130
      %p142 = scmp.eq.s32.totalorder %s20, 2
      %p143 = por %p141, %p142
      %p145 = scmp.ne.s32.totalorder %s130, %s144
      %p146 = scmp.eq.s32.totalorder %s20, 0
      %p147 = por %p145, %p146
      %s148 = ssub.s32 %s21, %s40
      %p149 = scmp.eq.s32.totalorder %s148, 0
      %s151 = sadd.s32 %s150, 1
      %s152 = scalar_select %p149, %s150, %s151
      %p155 = pneg %p149
      %p156 = scmp.eq.s32.totalorder %s14, 2
      %p157 = por %p155, %p156
      %p158 = scmp.ne.s32.totalorder %s150, %s153
      %p159 = scmp.eq.s32.totalorder %s14, 0
      %p160 = por %p158, %p159
      %p161 = scmp.ne.s32.totalorder %s150, %s153
      %p162 = scmp.eq.s32.totalorder %s19, 2
      %p163 = por %p161, %p162
      %p164 = scmp.ne.s32.totalorder %s153, %s154
      %p165 = scmp.eq.s32.totalorder %s19, 0
      %p166 = por %p164, %p165
      %p167 = scmp.ne.s32.totalorder %s153, %s154
      %p168 = scmp.eq.s32.totalorder %s20, 2
      %p169 = por %p167, %p168
      %p171 = scmp.ne.s32.totalorder %s154, %s170
      %p172 = scmp.eq.s32.totalorder %s20, 0
      %p173 = por %p171, %p172
      %p174 = scmp.le.s32.totalorder 1, %s14
      %p175 = scmp.lt.s32.totalorder %s14, 4
      %p176 = pnand %p174, %p175
      %p177 = pneg %p176
      // Predicated region
      $region9: #{tpu_custom_call.1} parent=5 // pred_check
        _
      $region10: #{tpu_custom_call.1} parent=5 // pred_check_branch
        %179 = sbr.rel (%p176) target = $region12
      $region11: #{tpu_custom_call.1} parent=5 // pred_region
        %s180 = ssub.s32 %s14, 1
        // Predicated region
        $region13: #{tpu_custom_call.1} parent=11 // pred_check
          %p181 = pneg %p140
        $region14: #{tpu_custom_call.1} parent=11 // pred_check_branch
          %183 = sbr.rel (%p181) target = $region16
        $region15: #{tpu_custom_call.1} parent=11 // pred_region
          _
        $region16: #{tpu_custom_call.1} parent=11 // pred_fallthru
          _
      $region12: #{tpu_custom_call.1} parent=5 // pred_fallthru
        _
      %p184 = scmp.lt.s32.totalorder %s14, 3
      // Predicated region
      $region17: #{tpu_custom_call.1} parent=5 // pred_check
        %p185 = pneg %p184
      $region18: #{tpu_custom_call.1} parent=5 // pred_check_branch
        %187 = sbr.rel (%p185) target = $region20
      $region19: #{tpu_custom_call.1} parent=5 // pred_region
        // Predicated region
        $region21: #{tpu_custom_call.1} parent=19 // pred_check
          %p188 = pneg %p57
        $region22: #{tpu_custom_call.1} parent=19 // pred_check_branch
          %190 = sbr.rel (%p188) target = $region24
        $region23: #{tpu_custom_call.1} parent=19 // pred_region
          %p191 = scmp.lt.s32.totalorder %s22, 2
          %s192 = scalar_select %p191, %s22, 2
          %p193 = scmp.lt.s32.totalorder %s21, 0
          %s194 = scalar_select %p193, %s21, 0
          %p195 = scmp.lt.s32.totalorder %s23, 0
          %s196 = scalar_select %p195, %s23, 0
          %s197 = sadd.s32 %s196, %s194
          %s198 = sadd.s32 %s197, %s192
          %s199 = smul.addr %s198, 8
          %s200 = scalar_lea.vmem %s0, %s199
        $region24: #{tpu_custom_call.1} parent=19 // pred_fallthru
          _
        // Predicated region
        $region25: #{tpu_custom_call.1} parent=19 // pred_check
          %p201 = pneg %p85
        $region26: #{tpu_custom_call.1} parent=19 // pred_check_branch
          %203 = sbr.rel (%p201) target = $region28
        $region27: #{tpu_custom_call.1} parent=19 // pred_region
          %s204 = sand.u32 %s75, 1
          %s205 = scalar_lea.sflag [#allocation4], %s204
          %s206 = sand.u32 %s75, 1
          %s207 = smul.addr %s206, 128
          %s208 = scalar_lea.vmem [#allocation3], %s207
          %s209 = smul.u32 16, %s23
          %s211 = ssub.s32 2048, 2048
          %212 = vsyncadd %s205, %s211
          %s213 = smul.addr %s22, 16
          %s214 = sadd.s32 %s209, %s213
          %s215 = smul.addr %s214, 128
          %s216 = scalar_lea.hbm %s1, %s215
          %s217 = sshll.u32 %s208, 4
          %s218 = int_to_ptr.vmem [resolvable:$true] %s217
          %223 = dma.hbm_to_vmem [thread:$0]  %s216, 2048, %s218, %s205, 128, 128, 8
        $region28: #{tpu_custom_call.1} parent=19 // pred_fallthru
          _
        // Predicated region
        $region29: #{tpu_custom_call.1} parent=19 // pred_check
          %p224 = pneg %p113
        $region30: #{tpu_custom_call.1} parent=19 // pred_check_branch
          %226 = sbr.rel (%p224) target = $region32
        $region31: #{tpu_custom_call.1} parent=19 // pred_region
          %p227 = scmp.lt.s32.totalorder %s22, 2
          %s228 = scalar_select %p227, %s22, 2
          %p229 = scmp.lt.s32.totalorder %s21, 0
          %s230 = scalar_select %p229, %s21, 0
          %s231 = sadd.s32 %s230, %s228
          %s232 = smul.addr %s231, 8
          %s233 = scalar_lea.vmem %s2, %s232
        $region32: #{tpu_custom_call.1} parent=19 // pred_fallthru
          _
      $region20: #{tpu_custom_call.1} parent=5 // pred_fallthru
        _
      %p234 = scmp.le.s32.totalorder 1, %s14
      %p235 = scmp.lt.s32.totalorder %s14, 4
      %p236 = pnand %p234, %p235
      %p237 = pneg %p236
      // Predicated region
      $region33: #{tpu_custom_call.1} parent=5 // pred_check
        _
      $region34: #{tpu_custom_call.1} parent=5 // pred_check_branch
        %239 = sbr.rel (%p236) target = $region36
      $region35: #{tpu_custom_call.1} parent=5 // pred_region
        %s240 = ssub.s32 %s14, 1
        %s241 = sand.u32 %s78, 1
        %s242 = scalar_lea.sflag [#allocation4], %s241
        %s243 = sand.u32 %s78, 1
        %s244 = smul.addr %s243, 128
        %s245 = scalar_lea.vmem [#allocation3], %s244
        // Predicated region
        $region37: #{tpu_custom_call.1} parent=35 // pred_check
          %p246 = pneg %p91
        $region38: #{tpu_custom_call.1} parent=35 // pred_check_branch
          %248 = sbr.rel (%p246) target = $region40
        $region39: #{tpu_custom_call.1} parent=35 // pred_region
          %249 = dma.done %s242, 2048
        $region40: #{tpu_custom_call.1} parent=35 // pred_fallthru
          _
        %p250 = scmp.lt.s32.totalorder %s25, 2
        %s251 = scalar_select %p250, %s25, 2
        %p252 = scmp.lt.s32.totalorder %s24, 0
        %s253 = scalar_select %p252, %s24, 0
        %p254 = scmp.lt.s32.totalorder %s26, 0
        %s255 = scalar_select %p254, %s26, 0
        %s256 = sadd.s32 %s255, %s253
        %s257 = sadd.s32 %s256, %s251
        %s258 = smul.addr %s257, 8
        %s259 = scalar_lea.vmem %s0, %s258
        %p260 = pneg %p63
        %p261 = pneg %p60
        %s262 = sand.u32 %s78, 1
        %s263 = scalar_lea.sflag [#allocation4], %s262
        %s264 = sand.u32 %s78, 1
        %s265 = smul.addr %s264, 128
        %s266 = scalar_lea.vmem [#allocation3], %s265
        %p267 = pneg %p91
        %p268 = pneg %p88
        %p269 = scmp.lt.s32.totalorder %s25, 2
        %s270 = scalar_select %p269, %s25, 2
        %p271 = scmp.lt.s32.totalorder %s24, 0
        %s272 = scalar_select %p271, %s24, 0
        %s273 = sadd.s32 %s272, %s270
        %s274 = smul.addr %s273, 8
        %s275 = scalar_lea.vmem %s2, %s274
        %p276 = pneg %p119
        %p277 = pneg %p116
        %p278 = pneg %p140
        %p279 = pneg %p137
        %p280 = pneg %p166
        %p281 = pneg %p163
        %p282 = scmp.lt.s32.totalorder %s25, 2
        %s283 = scalar_select %p282, %s25, 2
        %p284 = scmp.lt.s32.totalorder %s24, 0
        %s285 = scalar_select %p284, %s24, 0
        %p286 = scmp.lt.s32.totalorder %s26, 0
        %s287 = scalar_select %p286, %s26, 0
        %s288 = sadd.s32 %s287, %s285
        %s289 = sadd.s32 %s288, %s283
        %s290 = smul.addr %s289, 8
        %s291 = scalar_lea.vmem %s0, %s290
        %s292 = smul.u32 16, %s26
        %p293 = scmp.lt.s32.totalorder %s25, 2
        %s294 = scalar_select %p293, %s25, 2
        %p295 = scmp.lt.s32.totalorder %s24, 0
        %s296 = scalar_select %p295, %s24, 0
        %s297 = sadd.s32 %s296, %s294
        %s298 = smul.addr %s297, 8
        %s299 = scalar_lea.vmem %s2, %s298
        %p300 = scmp.eq.s32.totalorder %s25, 0
        %p301 = scmp.eq.s32.totalorder %s26, 0
        %p302 = pnand %p300, %p301
        %p303 = pneg %p302
        // Predicated region
        $region41: #{tpu_custom_call.1} parent=35 // pred_check
          _
        $region42: #{tpu_custom_call.1} parent=35 // pred_check_branch
          %305 = sbr.rel (%p302) target = $region44
        $region43: #{tpu_custom_call.1} parent=35 // pred_region
          %306 = vst [vmem:[#allocation6] sm:$0xff] 0.0
        $region44: #{tpu_custom_call.1} parent=35 // pred_fallthru
          _
        // Predicated region
        $region45: #{tpu_custom_call.1} parent=35 // pred_check
          %p307 = pneg %p301
        $region46: #{tpu_custom_call.1} parent=35 // pred_check_branch
          %309 = sbr.rel (%p307) target = $region48
        $region47: #{tpu_custom_call.1} parent=35 // pred_region
          %310 = vst [vmem:[#allocation2] sm:$0xff] 0.0
        $region48: #{tpu_custom_call.1} parent=35 // pred_fallthru
          _
        %v311 = vld [vmem:[%s245] sm:$0xff]
        %v312 = vld [vmem:[%s245 + $0x8] sm:$0xff]
        %v313 = vld [vmem:[%s245 + $0x10] sm:$0xff]
        %v314 = vld [vmem:[%s245 + $0x18] sm:$0xff]
        %v315 = vld [vmem:[%s245 + $0x20] sm:$0xff]
        %v316 = vld [vmem:[%s245 + $0x28] sm:$0xff]
        %v317 = vld [vmem:[%s245 + $0x30] sm:$0xff]
        %v318 = vld [vmem:[%s245 + $0x38] sm:$0xff]
        %v319 = vld [vmem:[%s245 + $0x40] sm:$0xff]
        %v320 = vld [vmem:[%s245 + $0x48] sm:$0xff]
        %v321 = vld [vmem:[%s245 + $0x50] sm:$0xff]
        %v322 = vld [vmem:[%s245 + $0x58] sm:$0xff]
        %v323 = vld [vmem:[%s245 + $0x60] sm:$0xff]
        %v324 = vld [vmem:[%s245 + $0x68] sm:$0xff]
        %v325 = vld [vmem:[%s245 + $0x70] sm:$0xff]
        %v326 = vld [vmem:[%s245 + $0x78] sm:$0xff]
        %v327 = vld [vmem:[%s291] sm:$0xff]
        %v328 = vld [vmem:[#allocation2] sm:$0xff]
        %329 = vmatprep.subr.mxu0 0.0
        %330 = vmatpush1.msra.mxu0 %v311
        %331 = vmatprep.subr.mxu0 0.0
        %332 = vmatpush1.msra.mxu0 %v312
        %333 = vmatprep.subr.mxu0 0.0
        %334 = vmatpush1.msra.mxu0 %v313
        %335 = vmatprep.subr.mxu0 0.0
        %336 = vmatpush1.msra.mxu0 %v314
        %337 = vmatprep.subr.mxu0 0.0
        %338 = vmatpush1.msra.mxu0 %v315
        %339 = vmatprep.subr.mxu0 0.0
        %340 = vmatpush1.msra.mxu0 %v316
        %341 = vmatprep.subr.mxu0 0.0
        %342 = vmatpush1.msra.mxu0 %v317
        %343 = vmatprep.subr.mxu0 0.0
        %344 = vmatpush1.msra.mxu0 %v318
        %345 = vmatprep.subr.mxu0 0.0
        %346 = vmatpush1.msra.mxu0 %v319
        %347 = vmatprep.subr.mxu0 0.0
        %348 = vmatpush1.msra.mxu0 %v320
        %349 = vmatprep.subr.mxu0 0.0
        %350 = vmatpush1.msra.mxu0 %v321
        %351 = vmatprep.subr.mxu0 0.0
        %352 = vmatpush1.msra.mxu0 %v322
        %353 = vmatprep.subr.mxu0 0.0
        %354 = vmatpush1.msra.mxu0 %v323
        %355 = vmatprep.subr.mxu0 0.0
        %356 = vmatpush1.msra.mxu0 %v324
        %357 = vmatprep.subr.mxu0 0.0
        %358 = vmatpush1.msra.mxu0 %v325
        %359 = vmatprep.subr.mxu0 0.0
        %360 = vmatpush1.msra.mxu0 %v326
        %361 = vmatprep.subr.mxu0 0.0
        %362 = vmatpush1.msra.mxu0 0.0
        %363 = vmatprep.subr.mxu0 0.0
        %364 = vmatpush1.msra.mxu0 0.0
        %365 = vmatprep.subr.mxu0 0.0
        %366 = vmatpush1.msra.mxu0 0.0
        %367 = vmatprep.subr.mxu0 0.0
        %368 = vmatpush1.msra.mxu0 0.0
        %369 = vmatprep.subr.mxu0 0.0
        %370 = vmatpush1.msra.mxu0 0.0
        %371 = vmatprep.subr.mxu0 0.0
        %372 = vmatpush1.msra.mxu0 0.0
        %373 = vmatprep.subr.mxu0 0.0
        %374 = vmatpush1.msra.mxu0 0.0
        %375 = vmatprep.subr.mxu0 0.0
        %376 = vmatpush1.msra.mxu0 0.0
        %377 = vmatprep.subr.mxu0 0.0
        %378 = vmatpush1.msra.mxu0 0.0
        %379 = vmatprep.subr.mxu0 0.0
        %380 = vmatpush1.msra.mxu0 0.0
        %381 = vmatprep.subr.mxu0 0.0
        %382 = vmatpush1.msra.mxu0 0.0
        %383 = vmatprep.subr.mxu0 0.0
        %384 = vmatpush1.msra.mxu0 0.0
        %385 = vmatprep.subr.mxu0 0.0
        %386 = vmatpush1.msra.mxu0 0.0
        %387 = vmatprep.subr.mxu0 0.0
        %388 = vmatpush1.msra.mxu0 0.0
        %389 = vmatprep.subr.mxu0 0.0
        %390 = vmatpush1.msra.mxu0 0.0
        %391 = vmatprep.subr.mxu0 0.0
        %392 = vmatpush1.msra.mxu0 0.0
        %393 = vmatprep.mubr.f32.mxu0 0.0
        %394 = vmatmul.mubr.f32.gmra.mrb[0].mxu0 %v327
        %v395 = vpop.f32.mrb[0].mxu0
        %v396 = vadd.f32 0.0, %v395
        %v397 = vpop.f32.mrb[0].mxu0
        %398 = vdwg.mxu0
        %v399 = vadd.f32 %v328, %v396
        %400 = vst [vmem:[#allocation2] sm:$0xff] %v399
        // Predicated region
        $region49: #{tpu_custom_call.1} parent=35 // pred_check
          %p401 = pneg %p301
        $region50: #{tpu_custom_call.1} parent=35 // pred_check_branch
          %403 = sbr.rel (%p401) target = $region52
        $region51: #{tpu_custom_call.1} parent=35 // pred_region
          %v404 = vld [vmem:[#allocation6] sm:$0xff]
          %v405 = vld [vmem:[#allocation2] sm:$0xff]
          %v406 = vld [vmem:[%s299] sm:$0xff]
          %408 = vset.pattern.permute.xlu0 0
          %409 = vperm.xlu0 %408, %v406
          %v410 = vpop.permute.xlu0 %409
          %v412 = vmul.f32 %v405, %v410
          %v413 = vadd.f32 %v404, %v412
          %414 = vst [vmem:[#allocation6] sm:$0xff] %v413
        $region52: #{tpu_custom_call.1} parent=35 // pred_fallthru
          _
        %p415 = scmp.eq.s32.totalorder %s25, 2
        %p416 = pnand %p415, %p301
        %p417 = pneg %p416
        // Predicated region
        $region53: #{tpu_custom_call.1} parent=35 // pred_check
          _
        $region54: #{tpu_custom_call.1} parent=35 // pred_check_branch
          %419 = sbr.rel (%p416) target = $region56
        $region55: #{tpu_custom_call.1} parent=35 // pred_region
          %v420 = vld [vmem:[#allocation6] sm:$0xff]
          %v421 = vld [vmem:[%s3] sm:$0x1]
          %v423 = vlaneseq
          %v424 = vshrl.u32 %v423, 7
          %v425 = vsub.s32 0, %v424
          %v426 = vrot.slane %v421, %v425
          %v428 = vadd.f32 %v420, %v426
          %v429 = vmax.f32 %v428, 0.0
          %430 = vst [vmem:[#allocation6] sm:$0xff] %v429
        $region56: #{tpu_custom_call.1} parent=35 // pred_fallthru
          _
        // Predicated region
        $region57: #{tpu_custom_call.1} parent=35 // pred_check
          %p431 = pneg %p163
        $region58: #{tpu_custom_call.1} parent=35 // pred_check_branch
          %433 = sbr.rel (%p431) target = $region60
        $region59: #{tpu_custom_call.1} parent=35 // pred_region
          %s435 = ssub.s32 128, 128
          %436 = vsyncadd [#allocation5], %s435
          %s437 = smul.addr %s24, 128
          %s438 = scalar_lea.hbm %s4, %s437
          %s440 = sshll.u32 [#allocation6], 4
          %s441 = int_to_ptr.vmem [resolvable:$true] %s440
          %443 = dma.vmem_to_hbm [thread:$0]  %s441, 128, %s438, [#allocation5]
        $region60: #{tpu_custom_call.1} parent=35 // pred_fallthru
          _
        // Predicated region
        $region61: #{tpu_custom_call.1} parent=35 // pred_check
          %p444 = pneg %p163
        $region62: #{tpu_custom_call.1} parent=35 // pred_check_branch
          %446 = sbr.rel (%p444) target = $region64
        $region63: #{tpu_custom_call.1} parent=35 // pred_region
          %447 = dma.done [#allocation5], 128
        $region64: #{tpu_custom_call.1} parent=35 // pred_fallthru
          _
      $region36: #{tpu_custom_call.1} parent=5 // pred_fallthru
        _
      %p448 = scmp.le.s32.totalorder 2, %s14
      // Predicated region
      $region65: #{tpu_custom_call.1} parent=5 // pred_check
        %p449 = pneg %p448
      $region66: #{tpu_custom_call.1} parent=5 // pred_check_branch
        %451 = sbr.rel (%p449) target = $region68
      $region67: #{tpu_custom_call.1} parent=5 // pred_region
        %s452 = ssub.s32 %s14, 2
      $region68: #{tpu_custom_call.1} parent=5 // pred_fallthru
        _
    $region6: #{tpu_custom_call.1} parent=1 // loop_footer
      %s18 = sadd.s32 1, %s14
    $region7: #{tpu_custom_call.1} parent=1 // loop_footer_branch
      %13 = sbr.rel target = $region3
    $region8: #{tpu_custom_call.1} parent=1 // loop_exit
      _
    %453 = vsyncpa [#allocation4], 1
    %s454 = scalar_lea.sflag [#allocation4], 1
    %455 = vsyncpa %s454, 1
    %456 = vsyncpa [#allocation5], 1
    %s457 = scalar_lea.sflag [#allocation5], 1
    %458 = vsyncpa %s457, 1

</llo_original>
